<compile_context>
chip_gen: v7x
topology: tpu7x:2x2x1
jax: 0.10.0
libtpu: 0.0.40
codegen_flags: <defaults>
</compile_context>

<pallas_src>
import functools

import jax
import jax.numpy as jnp
from jax.experimental import pallas as pl
from jax.experimental.pallas import tpu as pltpu

N_USER = 8
N_ITEM = 8
EMBED = 128          # embed_size
N_LAYER = 2          # args.layer
RESIDUAL = True      # args.residual
BATCH = 8            # number of (user, item) pairs scored in forward()
LANE = 128           # lane-padded scores width


# ----------------------------------------------------------------------------
# Fused kernel: propagation loop + one-hot gather + scoring (single output).
# ----------------------------------------------------------------------------
def mgrf_fused_kernel(lhs_ref, iw_ref, emb0_ref, u1h_ref, i1h_ref,   # VMEM inputs
                      scores_ref,                                     # VMEM output
                      *, n_user, n_layer):
    cdt = lhs_ref.dtype                                   # bf16 matmul operand dtype
    lhs = lhs_ref[...]                                    # (n_user + N, N) bf16, host-folded
    iw = iw_ref[...]                                      # (n_item, n_user) bf16

    all_emb = emb0_ref[...]                               # (N, E) f32, SSA (fits in vregs)
    acc = all_emb                                         # running sum for layer-mean

    for _ in range(n_layer):                              # static trip count
        rhs = all_emb.astype(cdt)                         # (N, E) bf16
        # One merged MXU matmul per layer:
        #   rows [0, n_user)        = users_weight @ Graph[n_user:, :] @ all_emb  (-> tanh)
        #   rows [n_user, n_user+N) = 0.5*(sim + I*res) @ all_emb  (residual + /2 folded)
        big = jnp.dot(lhs, rhs, preferred_element_type=jnp.float32)   # (n_user+N, E) f32
        users_t = jnp.tanh(big[:n_user, :])                           # (n_user, E) f32
        simf = big[n_user:, :]                                        # (N, E) f32
        items_t = jnp.tanh(jnp.dot(iw, users_t.astype(cdt),
                                   preferred_element_type=jnp.float32))   # (n_item, E)
        all_emb = jnp.concatenate(
            [jnp.float32(0.5) * users_t + simf[:n_user, :],
             jnp.float32(0.5) * items_t + simf[n_user:, :]], axis=0)  # (N, E) f32
        acc = acc + all_emb

    light_out = acc * jnp.float32(1.0 / (n_layer + 1))    # (N, E) f32 (never leaves VMEM)

    # --- fused scoring: one-hot row gathers on the MXU (exact: 0/1 f32) ------
    ug = jnp.dot(u1h_ref[...], light_out,
                 preferred_element_type=jnp.float32)      # (batch, E)
    ig = jnp.dot(i1h_ref[...], light_out,
                 preferred_element_type=jnp.float32)      # (LANE, E), rows >= batch are 0
    # scores[b] = <u_b, i_b>: diagonal of ug @ ig^T, emitted as a lane-dense
    # (1, LANE) row via iota mask + sublane reduce (no masked partial store).
    s_mat = jax.lax.dot_general(ug, ig,
                                dimension_numbers=(((1,), (1,)), ((), ())),
                                preferred_element_type=jnp.float32)   # (batch, LANE)
    row = jax.lax.broadcasted_iota(jnp.int32, s_mat.shape, 0)
    col = jax.lax.broadcasted_iota(jnp.int32, s_mat.shape, 1)
    diag = jnp.where(row == col, s_mat, jnp.float32(0.0))
    scores_ref[...] = jnp.sum(diag, axis=0, keepdims=True)            # (1, LANE)


# ----------------------------------------------------------------------------
# Wrapper: one-time host-side folding + the pallas_call.
# ----------------------------------------------------------------------------
def make_mgrf_forward(graph, sim, users_weight, items_weight, *,
                      n_user=N_USER, n_item=N_ITEM, embed=EMBED,
                      n_layer=N_LAYER, residual=RESIDUAL, batch=BATCH):
    n_total = n_user + n_item
    assert batch <= LANE

    # ---- one-time folding, hoisted out of the per-call jitted path ----------
    # residual (+I) and the /2 folded into the similarity block; users_weight
    # folded into the graph item rows; single bf16 cast for the matmul LHS.
    eye = jnp.eye(n_total, dtype=jnp.float32)
    sim_f = 0.5 * (sim + eye) if residual else 0.5 * sim
    lhs = jnp.concatenate([users_weight @ graph[n_user:, :], sim_f],
                          axis=0).astype(jnp.bfloat16)               # (n_user + N, N)
    iw = items_weight.astype(jnp.bfloat16)                           # (n_item, n_user)

    kernel = functools.partial(mgrf_fused_kernel, n_user=n_user, n_layer=n_layer)

    grid_spec = pltpu.PrefetchScalarGridSpec(
        num_scalar_prefetch=0,
        grid=(1,),
        in_specs=[
            pl.BlockSpec((n_user + n_total, n_total), lambda i: (0, 0)),  # stacked LHS (bf16)
            pl.BlockSpec((n_item, n_user), lambda i: (0, 0)),             # items_weight (bf16)
            pl.BlockSpec((n_total, embed), lambda i: (0, 0)),             # all_emb0 (f32)
            pl.BlockSpec((batch, n_total), lambda i: (0, 0)),             # user one-hot (f32)
            pl.BlockSpec((LANE, n_total), lambda i: (0, 0)),              # item one-hot, padded (f32)
        ],
        out_specs=pl.BlockSpec((1, LANE), lambda i: (0, 0)),              # scores row (lane-dense)
    )

    flops_layer = (2 * (n_user + n_total) * n_total * embed
                   + 2 * n_item * n_user * embed)
    flops_score = 2 * (batch + LANE) * n_total * embed + 2 * batch * embed * LANE
    cost = pl.CostEstimate(
        flops=n_layer * flops_layer + flops_score,
        transcendentals=n_layer * n_total * embed,
        bytes_accessed=(2 * ((n_user + n_total) * n_total + n_item * n_user)
                        + 4 * (n_total * embed + (batch + LANE) * n_total + LANE)),
    )

    call = pl.pallas_call(
        kernel,
        grid_spec=grid_spec,
        out_shape=jax.ShapeDtypeStruct((1, LANE), jnp.float32),
        compiler_params=pltpu.CompilerParams(
            dimension_semantics=("arbitrary",),
            # actual VMEM footprint is ~100 KiB; 4 MiB leaves ample headroom
            # without carrying an oversized limit into the future tiled version.
            vmem_limit_bytes=4 * 1024 * 1024),
        cost_estimate=cost,
    )

    @jax.jit
    def forward(users, items, embedding_user, embedding_item):
        all_emb0 = jnp.concatenate([embedding_user, embedding_item], axis=0)
        # One-hot gather matrices (an out-of-range index yields an all-zero row,
        # so there is no unchecked dynamic VMEM read inside the kernel).
        u1h = jax.nn.one_hot(users.astype(jnp.int32), n_total, dtype=jnp.float32)
        i1h = jax.nn.one_hot(items.astype(jnp.int32) + n_user, n_total, dtype=jnp.float32)
        i1h_pad = jnp.zeros((LANE, n_total), jnp.float32).at[:batch, :].set(i1h)
        scores_row = call(lhs, iw, all_emb0, u1h, i1h_pad)
        return scores_row[0, :batch]                                  # (batch,)

    return forward


# ----------------------------------------------------------------------------
# Pure-JAX f32 reference mirroring the PyTorch math (no folding / stacking).
# ----------------------------------------------------------------------------
def mgrf_forward_ref(users, items, graph, sim, users_weight, items_weight,
                     embedding_user, embedding_item):
    all_emb = jnp.concatenate([embedding_user, embedding_item], axis=0)
    embs = [all_emb]
    for _ in range(N_LAYER):
        side = graph @ all_emb
        it = side[N_USER:]
        us = jnp.tanh(users_weight @ it)
        it = jnp.tanh(items_weight @ us)
        side = jnp.concatenate([us, it], axis=0)
        if RESIDUAL:
            side = side + all_emb
        sim_emb = sim @ all_emb
        all_emb = (side + sim_emb) / 2.0
        embs.append(all_emb)
    light_out = jnp.mean(jnp.stack(embs, axis=1), axis=1)
    all_users, all_items = light_out[:N_USER], light_out[N_USER:]
    return jnp.sum(all_users[users] * all_items[items], axis=1)


if __name__ == "__main__":
    key = jax.random.PRNGKey(0)
    k_eu, k_ei, k_wu, k_wi, k_r, k_s, k_u, k_i = jax.random.split(key, 8)

    # nn.init.normal_(std=0.1) for the four embedding tables.
    embedding_user = 0.1 * jax.random.normal(k_eu, (N_USER, EMBED), jnp.float32)
    embedding_item = 0.1 * jax.random.normal(k_ei, (N_ITEM, EMBED), jnp.float32)
    users_weight = 0.1 * jax.random.normal(k_wu, (N_USER, N_ITEM), jnp.float32)
    items_weight = 0.1 * jax.random.normal(k_wi, (N_ITEM, N_USER), jnp.float32)

    # Synthetic normalized bipartite graph A_hat = D^-1/2 [[0,R],[R^T,0]] D^-1/2
    # (dense stand-in for dataset.getSparseGraph()).
    N = N_USER + N_ITEM
    R = (jax.random.uniform(k_r, (N_USER, N_ITEM)) < 0.4).astype(jnp.float32)
    A = jnp.zeros((N, N), jnp.float32)
    A = A.at[:N_USER, N_USER:].set(R)
    A = A.at[N_USER:, :N_USER].set(R.T)
    deg = jnp.sum(A, axis=1)
    d_inv_sqrt = jnp.where(deg > 0, 1.0 / jnp.sqrt(jnp.maximum(deg, 1e-12)), 0.0)
    graph = A * d_inv_sqrt[:, None] * d_inv_sqrt[None, :]

    # Synthetic row-normalized similarity matrix (dense stand-in for getSimilarity()).
    S = jax.random.uniform(k_s, (N, N), jnp.float32)
    similarity = S / jnp.sum(S, axis=1, keepdims=True)

    users = jax.random.randint(k_u, (BATCH,), 0, N_USER)
    items = jax.random.randint(k_i, (BATCH,), 0, N_ITEM)

    mgrf_forward = make_mgrf_forward(graph, similarity, users_weight, items_weight)
    scores = mgrf_forward(users, items, embedding_user, embedding_item)
    scores = jax.block_until_ready(scores)

    ref = mgrf_forward_ref(users, items, graph, similarity,
                           users_weight, items_weight,
                           embedding_user, embedding_item)
    assert scores.shape == (BATCH,)
    # bf16 matmul operands (f32 accumulation) -> loosened tolerance vs. f32 reference.
    assert jnp.allclose(scores, ref, atol=2e-2, rtol=2e-2), (scores, ref)

    print("KERNEL_OK")
</pallas_src>

<mosaic_0001>
module attributes {stable_mosaic.version = 11 : i64} {
  func.func @mgrf_fused_kernel(%arg0: i32, %arg1: memref<24x16xbf16, #tpu.memory_space<vmem>>, %arg2: memref<8x8xbf16, #tpu.memory_space<vmem>>, %arg3: memref<16x128xf32, #tpu.memory_space<vmem>>, %arg4: memref<8x16xf32, #tpu.memory_space<vmem>>, %arg5: memref<128x16xf32, #tpu.memory_space<vmem>>, %arg6: memref<1x128xf32, #tpu.memory_space<vmem>>) attributes {dimension_semantics = [#tpu.dimension_semantics<arbitrary>], iteration_bounds = array<i64: 1>, scalar_prefetch = 0 : i64, scratch_operands = 0 : i64, tpu.core_type = #tpu.core_type<tc>, window_params = [{pipeline_mode = #tpu.pipeline_mode<synchronous>, transform_indices = @transform_0, window_bounds = array<i64: 24, 16>}, {pipeline_mode = #tpu.pipeline_mode<synchronous>, transform_indices = @transform_1, window_bounds = array<i64: 8, 8>}, {pipeline_mode = #tpu.pipeline_mode<synchronous>, transform_indices = @transform_2, window_bounds = array<i64: 16, 128>}, {pipeline_mode = #tpu.pipeline_mode<synchronous>, transform_indices = @transform_3, window_bounds = array<i64: 8, 16>}, {pipeline_mode = #tpu.pipeline_mode<synchronous>, transform_indices = @transform_4, window_bounds = array<i64: 128, 16>}, {pipeline_mode = #tpu.pipeline_mode<synchronous>, transform_indices = @transform_5, window_bounds = array<i64: 1, 128>}]} {
    %c0 = arith.constant 0 : index
    %c0_0 = arith.constant 0 : index
    %0 = vector.load %arg1[%c0, %c0_0] : memref<24x16xbf16, #tpu.memory_space<vmem>>, vector<24x16xbf16>
    %c0_1 = arith.constant 0 : index
    %c0_2 = arith.constant 0 : index
    %1 = vector.load %arg2[%c0_1, %c0_2] : memref<8x8xbf16, #tpu.memory_space<vmem>>, vector<8x8xbf16>
    %c0_3 = arith.constant 0 : index
    %c0_4 = arith.constant 0 : index
    %2 = vector.load %arg3[%c0_3, %c0_4] : memref<16x128xf32, #tpu.memory_space<vmem>>, vector<16x128xf32>
    %3 = arith.truncf %2 : vector<16x128xf32> to vector<16x128xbf16>
    %cst = arith.constant dense<0.000000e+00> : vector<24x128xf32>
    %4 = tpu.matmul %0, %3, %cst {dimension_numbers = #tpu.dot_dimension_numbers<[1], [0], [0], [1], [0, 0, 1, 1], [], []>} : vector<24x16xbf16>, vector<16x128xbf16>, vector<24x128xf32> -> vector<24x128xf32>
    %5 = vector.extract_strided_slice %4 {offsets = [0, 0], sizes = [8, 128], strides = [1, 1]} : vector<24x128xf32> to vector<8x128xf32>
    %6 = math.tanh %5 : vector<8x128xf32>
    %7 = vector.extract_strided_slice %4 {offsets = [8, 0], sizes = [16, 128], strides = [1, 1]} : vector<24x128xf32> to vector<16x128xf32>
    %8 = arith.truncf %6 : vector<8x128xf32> to vector<8x128xbf16>
    %cst_5 = arith.constant dense<0.000000e+00> : vector<8x128xf32>
    %9 = tpu.matmul %1, %8, %cst_5 {dimension_numbers = #tpu.dot_dimension_numbers<[1], [0], [0], [1], [0, 0, 1, 1], [], []>} : vector<8x8xbf16>, vector<8x128xbf16>, vector<8x128xf32> -> vector<8x128xf32>
    %10 = math.tanh %9 : vector<8x128xf32>
    %cst_6 = arith.constant 5.000000e-01 : f32
    %11 = vector.broadcast %cst_6 : f32 to vector<8x128xf32>
    %12 = arith.mulf %11, %6 : vector<8x128xf32>
    %13 = vector.extract_strided_slice %7 {offsets = [0, 0], sizes = [8, 128], strides = [1, 1]} : vector<16x128xf32> to vector<8x128xf32>
    %14 = arith.addf %12, %13 : vector<8x128xf32>
    %cst_7 = arith.constant 5.000000e-01 : f32
    %15 = vector.broadcast %cst_7 : f32 to vector<8x128xf32>
    %16 = arith.mulf %15, %10 : vector<8x128xf32>
    %17 = vector.extract_strided_slice %7 {offsets = [8, 0], sizes = [8, 128], strides = [1, 1]} : vector<16x128xf32> to vector<8x128xf32>
    %18 = arith.addf %16, %17 : vector<8x128xf32>
    %19 = tpu.concatenate %14, %18 in 0 : vector<8x128xf32>, vector<8x128xf32> -> vector<16x128xf32>
    %20 = arith.addf %2, %19 : vector<16x128xf32>
    %21 = arith.truncf %19 : vector<16x128xf32> to vector<16x128xbf16>
    %cst_8 = arith.constant dense<0.000000e+00> : vector<24x128xf32>
    %22 = tpu.matmul %0, %21, %cst_8 {dimension_numbers = #tpu.dot_dimension_numbers<[1], [0], [0], [1], [0, 0, 1, 1], [], []>} : vector<24x16xbf16>, vector<16x128xbf16>, vector<24x128xf32> -> vector<24x128xf32>
    %23 = vector.extract_strided_slice %22 {offsets = [0, 0], sizes = [8, 128], strides = [1, 1]} : vector<24x128xf32> to vector<8x128xf32>
    %24 = math.tanh %23 : vector<8x128xf32>
    %25 = vector.extract_strided_slice %22 {offsets = [8, 0], sizes = [16, 128], strides = [1, 1]} : vector<24x128xf32> to vector<16x128xf32>
    %26 = arith.truncf %24 : vector<8x128xf32> to vector<8x128xbf16>
    %cst_9 = arith.constant dense<0.000000e+00> : vector<8x128xf32>
    %27 = tpu.matmul %1, %26, %cst_9 {dimension_numbers = #tpu.dot_dimension_numbers<[1], [0], [0], [1], [0, 0, 1, 1], [], []>} : vector<8x8xbf16>, vector<8x128xbf16>, vector<8x128xf32> -> vector<8x128xf32>
    %28 = math.tanh %27 : vector<8x128xf32>
    %cst_10 = arith.constant 5.000000e-01 : f32
    %29 = vector.broadcast %cst_10 : f32 to vector<8x128xf32>
    %30 = arith.mulf %29, %24 : vector<8x128xf32>
    %31 = vector.extract_strided_slice %25 {offsets = [0, 0], sizes = [8, 128], strides = [1, 1]} : vector<16x128xf32> to vector<8x128xf32>
    %32 = arith.addf %30, %31 : vector<8x128xf32>
    %cst_11 = arith.constant 5.000000e-01 : f32
    %33 = vector.broadcast %cst_11 : f32 to vector<8x128xf32>
    %34 = arith.mulf %33, %28 : vector<8x128xf32>
    %35 = vector.extract_strided_slice %25 {offsets = [8, 0], sizes = [8, 128], strides = [1, 1]} : vector<16x128xf32> to vector<8x128xf32>
    %36 = arith.addf %34, %35 : vector<8x128xf32>
    %37 = tpu.concatenate %32, %36 in 0 : vector<8x128xf32>, vector<8x128xf32> -> vector<16x128xf32>
    %38 = arith.addf %20, %37 : vector<16x128xf32>
    %cst_12 = arith.constant 0.333333343 : f32
    %39 = vector.broadcast %cst_12 : f32 to vector<16x128xf32>
    %40 = arith.mulf %38, %39 : vector<16x128xf32>
    %c0_13 = arith.constant 0 : index
    %c0_14 = arith.constant 0 : index
    %41 = vector.load %arg4[%c0_13, %c0_14] : memref<8x16xf32, #tpu.memory_space<vmem>>, vector<8x16xf32>
    %cst_15 = arith.constant dense<0.000000e+00> : vector<8x128xf32>
    %42 = tpu.matmul %41, %40, %cst_15 {dimension_numbers = #tpu.dot_dimension_numbers<[1], [0], [0], [1], [0, 0, 1, 1], [], []>} : vector<8x16xf32>, vector<16x128xf32>, vector<8x128xf32> -> vector<8x128xf32>
    %c0_16 = arith.constant 0 : index
    %c0_17 = arith.constant 0 : index
    %43 = vector.load %arg5[%c0_16, %c0_17] : memref<128x16xf32, #tpu.memory_space<vmem>>, vector<128x16xf32>
    %cst_18 = arith.constant dense<0.000000e+00> : vector<128x128xf32>
    %44 = tpu.matmul %43, %40, %cst_18 {dimension_numbers = #tpu.dot_dimension_numbers<[1], [0], [0], [1], [0, 0, 1, 1], [], []>} : vector<128x16xf32>, vector<16x128xf32>, vector<128x128xf32> -> vector<128x128xf32>
    %cst_19 = arith.constant dense<0.000000e+00> : vector<8x128xf32>
    %45 = tpu.matmul %42, %44, %cst_19 {dimension_numbers = #tpu.dot_dimension_numbers<[1], [1], [0], [0], [0, 0, 1, 0], [], []>} : vector<8x128xf32>, vector<128x128xf32>, vector<8x128xf32> -> vector<8x128xf32>
    %46 = tpu.iota {dimensions = array<i32: 0>} : vector<8x128xi32>
    %47 = tpu.iota {dimensions = array<i32: 1>} : vector<8x128xi32>
    %48 = arith.cmpi eq, %46, %47 : vector<8x128xi32>
    %cst_20 = arith.constant 0.000000e+00 : f32
    %49 = vector.broadcast %cst_20 : f32 to vector<8x128xf32>
    %50 = arith.select %48, %45, %49 : vector<8x128xi1>, vector<8x128xf32>
    %cst_21 = arith.constant dense<0.000000e+00> : vector<128xf32>
    %51 = vector.multi_reduction <add>, %50, %cst_21 [0] : vector<8x128xf32> to vector<128xf32>
    %52 = vector.shape_cast %51 : vector<128xf32> to vector<1x128xf32>
    %c0_22 = arith.constant 0 : index
    %c0_23 = arith.constant 0 : index
    %53 = vector.load %arg6[%c0_22, %c0_23] : memref<1x128xf32, #tpu.memory_space<vmem>>, vector<1x128xf32>
    tpu.vector_store %arg6[%c0_22, %c0_23], %52 {strides = array<i32>} : memref<1x128xf32, #tpu.memory_space<vmem>>, vector<1x128xf32>,
    return
  }
  func.func @transform_0(%arg0: i32) -> (i32, i32) {
    %c0_i32 = arith.constant 0 : i32
    %c0_i32_0 = arith.constant 0 : i32
    %c0_i32_1 = arith.constant 0 : i32
    return %c0_i32, %c0_i32_0 : i32, i32
  }
  func.func @transform_1(%arg0: i32) -> (i32, i32) {
    %c0_i32 = arith.constant 0 : i32
    %c0_i32_0 = arith.constant 0 : i32
    %c0_i32_1 = arith.constant 0 : i32
    return %c0_i32, %c0_i32_0 : i32, i32
  }
  func.func @transform_2(%arg0: i32) -> (i32, i32) {
    %c0_i32 = arith.constant 0 : i32
    %c0_i32_0 = arith.constant 0 : i32
    %c0_i32_1 = arith.constant 0 : i32
    return %c0_i32, %c0_i32_0 : i32, i32
  }
  func.func @transform_3(%arg0: i32) -> (i32, i32) {
    %c0_i32 = arith.constant 0 : i32
    %c0_i32_0 = arith.constant 0 : i32
    %c0_i32_1 = arith.constant 0 : i32
    return %c0_i32, %c0_i32_0 : i32, i32
  }
  func.func @transform_4(%arg0: i32) -> (i32, i32) {
    %c0_i32 = arith.constant 0 : i32
    %c0_i32_0 = arith.constant 0 : i32
    %c0_i32_1 = arith.constant 0 : i32
    return %c0_i32, %c0_i32_0 : i32, i32
  }
  func.func @transform_5(%arg0: i32) -> (i32, i32) {
    %c0_i32 = arith.constant 0 : i32
    %c0_i32_0 = arith.constant 0 : i32
    %c0_i32_1 = arith.constant 0 : i32
    return %c0_i32, %c0_i32_0 : i32, i32
  }
}

</mosaic_0001>

<llo_original>
// kernel: forward.1
$region0: #{forward.1}
  #allocation0 [shape = 'u32[]', space=smem, size = 0x4, offset = 0x4, fixed_abs, tag = 'smem constant byte address 0x4 - core index']
  #allocation1 [shape = 'u32[144,128]{1,0:T(1,128)}', space=vmem, size = 0x12000, scoped, tag = 'internal scratch']
  %s0 = inlined_call_operand.vmem [shape: bf16[24,16], index: 0, kind: input, shape index: {}]
  %s1 = inlined_call_operand.vmem [shape: bf16[8,8], index: 1, kind: input, shape index: {}]
  %s2 = inlined_call_operand.vmem [shape: f32[16,128], index: 2, kind: input, shape index: {}]
  %s3 = inlined_call_operand.vmem [shape: f32[8,16], index: 3, kind: input, shape index: {}]
  %s4 = inlined_call_operand.vmem [shape: f32[128,16], index: 4, kind: input, shape index: {}]
  %s5 = inlined_call_operand.vmem [shape: f32[1,128], index: 5, kind: output, shape index: {}]
  %s6 = sld [smem:[#allocation0]]
  $region30: #{forward.1} parent=0
    _
  %s8 = ssub.s32 1, %s6
  %s9 = scalar_select 0, %s8, %s6
  // Predicated region
  $region2: #{forward.1} parent=0 // pred_check
    _
  $region3: #{forward.1} parent=0 // pred_check_branch
    %11 = sbr.rel (0) target = $region5
  $region4: #{forward.1} parent=0 // pred_region
    _
  $region5: #{forward.1} parent=0 // pred_fallthru
    _
  // Predicated region
  $region6: #{forward.1} parent=0 // pred_check
    _
  $region7: #{forward.1} parent=0 // pred_check_branch
    %13 = sbr.rel (0) target = $region9
  $region8: #{forward.1} parent=0 // pred_region
    _
  $region9: #{forward.1} parent=0 // pred_fallthru
    _
  // Predicated region
  $region10: #{forward.1} parent=0 // pred_check
    _
  $region11: #{forward.1} parent=0 // pred_check_branch
    %15 = sbr.rel (0) target = $region13
  $region12: #{forward.1} parent=0 // pred_region
    _
  $region13: #{forward.1} parent=0 // pred_fallthru
    _
  // Predicated region
  $region14: #{forward.1} parent=0 // pred_check
    _
  $region15: #{forward.1} parent=0 // pred_check_branch
    %17 = sbr.rel (0) target = $region17
  $region16: #{forward.1} parent=0 // pred_region
    _
  $region17: #{forward.1} parent=0 // pred_fallthru
    _
  // Predicated region
  $region18: #{forward.1} parent=0 // pred_check
    _
  $region19: #{forward.1} parent=0 // pred_check_branch
    %19 = sbr.rel (0) target = $region21
  $region20: #{forward.1} parent=0 // pred_region
    _
  $region21: #{forward.1} parent=0 // pred_fallthru
    _
  %v21 = vld [vmem:[%s0] sm:$0xf]
  %v22 = vld [vmem:[%s0 + $0x4] sm:$0xf]
  %v23 = vld [vmem:[%s0 + $0x8] sm:$0xf]
  %v24 = vld [vmem:[%s1] sm:$0xf]
  %v25 = vld [vmem:[%s2] sm:$0xff]
  %v26 = vld [vmem:[%s2 + $0x8] sm:$0xff]
  %v27 = vpack.c.bf16 %v26, %v25
  %v31 = vunpack.c.l.b16 %v21
  %v32 = vunpack.c.l.b16 %v22
  %v33 = vunpack.c.l.b16 %v23
  %v34 = vpack.c.b16 %v32, %v31
  %v35 = vpack.c.b16 %v33, %v33
  %vm36 = vcmask 130048
  %v38 = vsel %vm36, %v34, 0
  %v41 = vsel %vm36, %v35, 0
  %43 = vmatprep.subr.bf16.mxu0 0
  %44 = vmatpush1.bf16.msra.mxu0 %v27
  %45 = vmatprep.subr.bf16.mxu0 0
  %46 = vmatpush1.bf16.msra.mxu0 0
  %47 = vmatprep.subr.bf16.mxu0 0
  %48 = vmatpush1.bf16.msra.mxu0 0
  %49 = vmatprep.subr.bf16.mxu0 0
  %50 = vmatpush1.bf16.msra.mxu0 0
  %51 = vmatprep.subr.bf16.mxu0 0
  %52 = vmatpush1.bf16.msra.mxu0 0
  %53 = vmatprep.subr.bf16.mxu0 0
  %54 = vmatpush1.bf16.msra.mxu0 0
  %55 = vmatprep.subr.bf16.mxu0 0
  %56 = vmatpush1.bf16.msra.mxu0 0
  %57 = vmatprep.subr.bf16.mxu0 0
  %58 = vmatpush1.bf16.msra.mxu0 0
  %59 = vmatprep.subr.bf16.mxu0 0
  %60 = vmatpush1.bf16.msra.mxu0 0
  %61 = vmatprep.subr.bf16.mxu0 0
  %62 = vmatpush1.bf16.msra.mxu0 0
  %63 = vmatprep.subr.bf16.mxu0 0
  %64 = vmatpush1.bf16.msra.mxu0 0
  %65 = vmatprep.subr.bf16.mxu0 0
  %66 = vmatpush1.bf16.msra.mxu0 0
  %67 = vmatprep.subr.bf16.mxu0 0
  %68 = vmatpush1.bf16.msra.mxu0 0
  %69 = vmatprep.subr.bf16.mxu0 0
  %70 = vmatpush1.bf16.msra.mxu0 0
  %71 = vmatprep.subr.bf16.mxu0 0
  %72 = vmatpush1.bf16.msra.mxu0 0
  %73 = vmatprep.subr.bf16.mxu0 0
  %74 = vmatpush1.bf16.msra.mxu0 0
  %75 = vmatprep.mubr.bf16.mxu0 0
  %76 = vmatmul.mubr.bf16.gmra.mrb[0].mxu0 %v38
  %v77 = vpop.f32.mrb[0].mxu0
  %v78 = vadd.f32 0.0, %v77
  %v79 = vpop.f32.mrb[0].mxu0
  %v80 = vpop.f32.mrb[0].mxu0
  %v81 = vadd.f32 0.0, %v80
  %v82 = vpop.f32.mrb[0].mxu0
  %83 = vmatprep.mubr.bf16.mxu0 0
  %84 = vmatmul.mubr.bf16.gmra.mrb[0].mxu0 %v41
  %v85 = vpop.f32.mrb[0].mxu0
  %v86 = vadd.f32 0.0, %v85
  %v87 = vpop.f32.mrb[0].mxu0
  %v88 = vpop.f32.mrb[0].mxu0
  %v89 = vpop.f32.mrb[0].mxu0
  %90 = vdwg.mxu0
  %v91 = vtanh.pop %v78
  %v92 = vpack.c.bf16 %v91, %v91
  %vm93 = vcmask 64512
  %v95 = vsel %vm93, %v24, 0
  %vm97 = vcmask 1043456
  %v99 = vsel %vm97, %v92, 0
  %101 = vmatprep.subr.bf16.mxu0 0
  %102 = vmatpush1.bf16.msra.mxu0 %v99
  %103 = vmatprep.subr.bf16.mxu0 0
  %104 = vmatpush1.bf16.msra.mxu0 0
  %105 = vmatprep.subr.bf16.mxu0 0
  %106 = vmatpush1.bf16.msra.mxu0 0
  %107 = vmatprep.subr.bf16.mxu0 0
  %108 = vmatpush1.bf16.msra.mxu0 0
  %109 = vmatprep.subr.bf16.mxu0 0
  %110 = vmatpush1.bf16.msra.mxu0 0
  %111 = vmatprep.subr.bf16.mxu0 0
  %112 = vmatpush1.bf16.msra.mxu0 0
  %113 = vmatprep.subr.bf16.mxu0 0
  %114 = vmatpush1.bf16.msra.mxu0 0
  %115 = vmatprep.subr.bf16.mxu0 0
  %116 = vmatpush1.bf16.msra.mxu0 0
  %117 = vmatprep.subr.bf16.mxu0 0
  %118 = vmatpush1.bf16.msra.mxu0 0
  %119 = vmatprep.subr.bf16.mxu0 0
  %120 = vmatpush1.bf16.msra.mxu0 0
  %121 = vmatprep.subr.bf16.mxu0 0
  %122 = vmatpush1.bf16.msra.mxu0 0
  %123 = vmatprep.subr.bf16.mxu0 0
  %124 = vmatpush1.bf16.msra.mxu0 0
  %125 = vmatprep.subr.bf16.mxu0 0
  %126 = vmatpush1.bf16.msra.mxu0 0
  %127 = vmatprep.subr.bf16.mxu0 0
  %128 = vmatpush1.bf16.msra.mxu0 0
  %129 = vmatprep.subr.bf16.mxu0 0
  %130 = vmatpush1.bf16.msra.mxu0 0
  %131 = vmatprep.subr.bf16.mxu0 0
  %132 = vmatpush1.bf16.msra.mxu0 0
  %133 = vmatprep.mubr.bf16.mxu0 0
  %134 = vmatmul.mubr.bf16.gmra.mrb[0].mxu0 %v95
  %v135 = vpop.f32.mrb[0].mxu0
  %v136 = vadd.f32 0.0, %v135
  %v137 = vpop.f32.mrb[0].mxu0
  %v138 = vpop.f32.mrb[0].mxu0
  %v139 = vpop.f32.mrb[0].mxu0
  %140 = vdwg.mxu0
  %v141 = vtanh.pop %v136
  %v142 = vmul.f32 %v91, 0.5
  %v143 = vadd.f32 %v142, %v81
  %v144 = vmul.f32 %v141, 0.5
  %v145 = vadd.f32 %v144, %v86
  %v146 = vadd.f32 %v25, %v143
  %v147 = vadd.f32 %v26, %v145
  %v148 = vpack.c.bf16 %v145, %v143
  %149 = vmatprep.subr.bf16.mxu0 0
  %150 = vmatpush1.bf16.msra.mxu0 %v148
  %151 = vmatprep.subr.bf16.mxu0 0
  %152 = vmatpush1.bf16.msra.mxu0 0
  %153 = vmatprep.subr.bf16.mxu0 0
  %154 = vmatpush1.bf16.msra.mxu0 0
  %155 = vmatprep.subr.bf16.mxu0 0
  %156 = vmatpush1.bf16.msra.mxu0 0
  %157 = vmatprep.subr.bf16.mxu0 0
  %158 = vmatpush1.bf16.msra.mxu0 0
  %159 = vmatprep.subr.bf16.mxu0 0
  %160 = vmatpush1.bf16.msra.mxu0 0
  %161 = vmatprep.subr.bf16.mxu0 0
  %162 = vmatpush1.bf16.msra.mxu0 0
  %163 = vmatprep.subr.bf16.mxu0 0
  %164 = vmatpush1.bf16.msra.mxu0 0
  %165 = vmatprep.subr.bf16.mxu0 0
  %166 = vmatpush1.bf16.msra.mxu0 0
  %167 = vmatprep.subr.bf16.mxu0 0
  %168 = vmatpush1.bf16.msra.mxu0 0
  %169 = vmatprep.subr.bf16.mxu0 0
  %170 = vmatpush1.bf16.msra.mxu0 0
  %171 = vmatprep.subr.bf16.mxu0 0
  %172 = vmatpush1.bf16.msra.mxu0 0
  %173 = vmatprep.subr.bf16.mxu0 0
  %174 = vmatpush1.bf16.msra.mxu0 0
  %175 = vmatprep.subr.bf16.mxu0 0
  %176 = vmatpush1.bf16.msra.mxu0 0
  %177 = vmatprep.subr.bf16.mxu0 0
  %178 = vmatpush1.bf16.msra.mxu0 0
  %179 = vmatprep.subr.bf16.mxu0 0
  %180 = vmatpush1.bf16.msra.mxu0 0
  %181 = vmatprep.mubr.bf16.mxu0 0
  %182 = vmatmul.mubr.bf16.gmra.mrb[0].mxu0 %v38
  %v183 = vpop.f32.mrb[0].mxu0
  %v184 = vadd.f32 0.0, %v183
  %v185 = vpop.f32.mrb[0].mxu0
  %v186 = vpop.f32.mrb[0].mxu0
  %v187 = vadd.f32 0.0, %v186
  %v188 = vpop.f32.mrb[0].mxu0
  %189 = vmatprep.mubr.bf16.mxu0 0
  %190 = vmatmul.mubr.bf16.gmra.mrb[0].mxu0 %v41
  %v191 = vpop.f32.mrb[0].mxu0
  %v192 = vadd.f32 0.0, %v191
  %v193 = vpop.f32.mrb[0].mxu0
  %v194 = vpop.f32.mrb[0].mxu0
  %v195 = vpop.f32.mrb[0].mxu0
  %196 = vdwg.mxu0
  %v197 = vtanh.pop %v184
  %v198 = vpack.c.bf16 %v197, %v197
  %v200 = vsel %vm97, %v198, 0
  %202 = vmatprep.subr.bf16.mxu0 0
  %203 = vmatpush1.bf16.msra.mxu0 %v200
  %204 = vmatprep.subr.bf16.mxu0 0
  %205 = vmatpush1.bf16.msra.mxu0 0
  %206 = vmatprep.subr.bf16.mxu0 0
  %207 = vmatpush1.bf16.msra.mxu0 0
  %208 = vmatprep.subr.bf16.mxu0 0
  %209 = vmatpush1.bf16.msra.mxu0 0
  %210 = vmatprep.subr.bf16.mxu0 0
  %211 = vmatpush1.bf16.msra.mxu0 0
  %212 = vmatprep.subr.bf16.mxu0 0
  %213 = vmatpush1.bf16.msra.mxu0 0
  %214 = vmatprep.subr.bf16.mxu0 0
  %215 = vmatpush1.bf16.msra.mxu0 0
  %216 = vmatprep.subr.bf16.mxu0 0
  %217 = vmatpush1.bf16.msra.mxu0 0
  %218 = vmatprep.subr.bf16.mxu0 0
  %219 = vmatpush1.bf16.msra.mxu0 0
  %220 = vmatprep.subr.bf16.mxu0 0
  %221 = vmatpush1.bf16.msra.mxu0 0
  %222 = vmatprep.subr.bf16.mxu0 0
  %223 = vmatpush1.bf16.msra.mxu0 0
  %224 = vmatprep.subr.bf16.mxu0 0
  %225 = vmatpush1.bf16.msra.mxu0 0
  %226 = vmatprep.subr.bf16.mxu0 0
  %227 = vmatpush1.bf16.msra.mxu0 0
  %228 = vmatprep.subr.bf16.mxu0 0
  %229 = vmatpush1.bf16.msra.mxu0 0
  %230 = vmatprep.subr.bf16.mxu0 0
  %231 = vmatpush1.bf16.msra.mxu0 0
  %232 = vmatprep.subr.bf16.mxu0 0
  %233 = vmatpush1.bf16.msra.mxu0 0
  %234 = vmatprep.mubr.bf16.mxu0 0
  %235 = vmatmul.mubr.bf16.gmra.mrb[0].mxu0 %v95
  %v236 = vpop.f32.mrb[0].mxu0
  %v237 = vadd.f32 0.0, %v236
  %v238 = vpop.f32.mrb[0].mxu0
  %v239 = vpop.f32.mrb[0].mxu0
  %v240 = vpop.f32.mrb[0].mxu0
  %241 = vdwg.mxu0
  %v242 = vtanh.pop %v237
  %v243 = vmul.f32 %v197, 0.5
  %v244 = vadd.f32 %v243, %v187
  %v245 = vmul.f32 %v242, 0.5
  %v246 = vadd.f32 %v245, %v192
  %v247 = vadd.f32 %v146, %v244
  %v248 = vadd.f32 %v147, %v246
  %v249 = vmul.f32 %v247, 0.33333334
  %v250 = vmul.f32 %v248, 0.33333334
  %v251 = vld [vmem:[%s3] sm:$0xff]
  %v253 = vsel %vm36, %v251, 0
  %255 = vmatprep.subr.mxu0 0.0
  %256 = vmatpush1.msra.mxu0 %v249
  %257 = vmatprep.subr.mxu0 0.0
  %258 = vmatpush1.msra.mxu0 %v250
  %259 = vmatprep.subr.mxu0 0.0
  %260 = vmatpush1.msra.mxu0 0.0
  %261 = vmatprep.subr.mxu0 0.0
  %262 = vmatpush1.msra.mxu0 0.0
  %263 = vmatprep.subr.mxu0 0.0
  %264 = vmatpush1.msra.mxu0 0.0
  %265 = vmatprep.subr.mxu0 0.0
  %266 = vmatpush1.msra.mxu0 0.0
  %267 = vmatprep.subr.mxu0 0.0
  %268 = vmatpush1.msra.mxu0 0.0
  %269 = vmatprep.subr.mxu0 0.0
  %270 = vmatpush1.msra.mxu0 0.0
  %271 = vmatprep.subr.mxu0 0.0
  %272 = vmatpush1.msra.mxu0 0.0
  %273 = vmatprep.subr.mxu0 0.0
  %274 = vmatpush1.msra.mxu0 0.0
  %275 = vmatprep.subr.mxu0 0.0
  %276 = vmatpush1.msra.mxu0 0.0
  %277 = vmatprep.subr.mxu0 0.0
  %278 = vmatpush1.msra.mxu0 0.0
  %279 = vmatprep.subr.mxu0 0.0
  %280 = vmatpush1.msra.mxu0 0.0
  %281 = vmatprep.subr.mxu0 0.0
  %282 = vmatpush1.msra.mxu0 0.0
  %283 = vmatprep.subr.mxu0 0.0
  %284 = vmatpush1.msra.mxu0 0.0
  %285 = vmatprep.subr.mxu0 0.0
  %286 = vmatpush1.msra.mxu0 0.0
  %287 = vmatprep.subr.mxu0 0.0
  %288 = vmatpush1.msra.mxu0 0.0
  %289 = vmatprep.subr.mxu0 0.0
  %290 = vmatpush1.msra.mxu0 0.0
  %291 = vmatprep.subr.mxu0 0.0
  %292 = vmatpush1.msra.mxu0 0.0
  %293 = vmatprep.subr.mxu0 0.0
  %294 = vmatpush1.msra.mxu0 0.0
  %295 = vmatprep.subr.mxu0 0.0
  %296 = vmatpush1.msra.mxu0 0.0
  %297 = vmatprep.subr.mxu0 0.0
  %298 = vmatpush1.msra.mxu0 0.0
  %299 = vmatprep.subr.mxu0 0.0
  %300 = vmatpush1.msra.mxu0 0.0
  %301 = vmatprep.subr.mxu0 0.0
  %302 = vmatpush1.msra.mxu0 0.0
  %303 = vmatprep.subr.mxu0 0.0
  %304 = vmatpush1.msra.mxu0 0.0
  %305 = vmatprep.subr.mxu0 0.0
  %306 = vmatpush1.msra.mxu0 0.0
  %307 = vmatprep.subr.mxu0 0.0
  %308 = vmatpush1.msra.mxu0 0.0
  %309 = vmatprep.subr.mxu0 0.0
  %310 = vmatpush1.msra.mxu0 0.0
  %311 = vmatprep.subr.mxu0 0.0
  %312 = vmatpush1.msra.mxu0 0.0
  %313 = vmatprep.subr.mxu0 0.0
  %314 = vmatpush1.msra.mxu0 0.0
  %315 = vmatprep.subr.mxu0 0.0
  %316 = vmatpush1.msra.mxu0 0.0
  %317 = vmatprep.subr.mxu0 0.0
  %318 = vmatpush1.msra.mxu0 0.0
  %319 = vmatprep.mubr.f32.mxu0 0.0
  %320 = vmatmul.mubr.f32.gmra.mrb[0].mxu0 %v253
  %v321 = vpop.f32.mrb[0].mxu0
  %v322 = vadd.f32 0.0, %v321
  %v323 = vpop.f32.mrb[0].mxu0
  %324 = vdwg.mxu0
  %v325 = vld [vmem:[%s4] sm:$0xff]
  %v326 = vld [vmem:[%s4 + $0x8] sm:$0xff]
  %v327 = vld [vmem:[%s4 + $0x10] sm:$0xff]
  %v328 = vld [vmem:[%s4 + $0x18] sm:$0xff]
  %v329 = vld [vmem:[%s4 + $0x20] sm:$0xff]
  %v330 = vld [vmem:[%s4 + $0x28] sm:$0xff]
  %v331 = vld [vmem:[%s4 + $0x30] sm:$0xff]
  %v332 = vld [vmem:[%s4 + $0x38] sm:$0xff]
  %v333 = vld [vmem:[%s4 + $0x40] sm:$0xff]
  %v334 = vld [vmem:[%s4 + $0x48] sm:$0xff]
  %v335 = vld [vmem:[%s4 + $0x50] sm:$0xff]
  %v336 = vld [vmem:[%s4 + $0x58] sm:$0xff]
  %v337 = vld [vmem:[%s4 + $0x60] sm:$0xff]
  %v338 = vld [vmem:[%s4 + $0x68] sm:$0xff]
  %v339 = vld [vmem:[%s4 + $0x70] sm:$0xff]
  %v340 = vld [vmem:[%s4 + $0x78] sm:$0xff]
  %v342 = vsel %vm36, %v325, 0
  %v345 = vsel %vm36, %v326, 0
  %v348 = vsel %vm36, %v327, 0
  %v351 = vsel %vm36, %v328, 0
  %v354 = vsel %vm36, %v329, 0
  %v357 = vsel %vm36, %v330, 0
  %v360 = vsel %vm36, %v331, 0
  %v363 = vsel %vm36, %v332, 0
  %v366 = vsel %vm36, %v333, 0
  %v369 = vsel %vm36, %v334, 0
  %v372 = vsel %vm36, %v335, 0
  %v375 = vsel %vm36, %v336, 0
  %v378 = vsel %vm36, %v337, 0
  %v381 = vsel %vm36, %v338, 0
  %v384 = vsel %vm36, %v339, 0
  %v387 = vsel %vm36, %v340, 0
  %389 = vmatprep.subr.mxu0 0.0
  %390 = vmatpush1.msra.mxu0 %v249
  %391 = vmatprep.subr.mxu0 0.0
  %392 = vmatpush1.msra.mxu0 %v250
  %393 = vmatprep.subr.mxu0 0.0
  %394 = vmatpush1.msra.mxu0 0.0
  %395 = vmatprep.subr.mxu0 0.0
  %396 = vmatpush1.msra.mxu0 0.0
  %397 = vmatprep.subr.mxu0 0.0
  %398 = vmatpush1.msra.mxu0 0.0
  %399 = vmatprep.subr.mxu0 0.0
  %400 = vmatpush1.msra.mxu0 0.0
  %401 = vmatprep.subr.mxu0 0.0
  %402 = vmatpush1.msra.mxu0 0.0
  %403 = vmatprep.subr.mxu0 0.0
  %404 = vmatpush1.msra.mxu0 0.0
  %405 = vmatprep.subr.mxu0 0.0
  %406 = vmatpush1.msra.mxu0 0.0
  %407 = vmatprep.subr.mxu0 0.0
  %408 = vmatpush1.msra.mxu0 0.0
  %409 = vmatprep.subr.mxu0 0.0
  %410 = vmatpush1.msra.mxu0 0.0
  %411 = vmatprep.subr.mxu0 0.0
  %412 = vmatpush1.msra.mxu0 0.0
  %413 = vmatprep.subr.mxu0 0.0
  %414 = vmatpush1.msra.mxu0 0.0
  %415 = vmatprep.subr.mxu0 0.0
  %416 = vmatpush1.msra.mxu0 0.0
  %417 = vmatprep.subr.mxu0 0.0
  %418 = vmatpush1.msra.mxu0 0.0
  %419 = vmatprep.subr.mxu0 0.0
  %420 = vmatpush1.msra.mxu0 0.0
  %421 = vmatprep.subr.mxu0 0.0
  %422 = vmatpush1.msra.mxu0 0.0
  %423 = vmatprep.subr.mxu0 0.0
  %424 = vmatpush1.msra.mxu0 0.0
  %425 = vmatprep.subr.mxu0 0.0
  %426 = vmatpush1.msra.mxu0 0.0
  %427 = vmatprep.subr.mxu0 0.0
  %428 = vmatpush1.msra.mxu0 0.0
  %429 = vmatprep.subr.mxu0 0.0
  %430 = vmatpush1.msra.mxu0 0.0
  %431 = vmatprep.subr.mxu0 0.0
  %432 = vmatpush1.msra.mxu0 0.0
  %433 = vmatprep.subr.mxu0 0.0
  %434 = vmatpush1.msra.mxu0 0.0
  %435 = vmatprep.subr.mxu0 0.0
  %436 = vmatpush1.msra.mxu0 0.0
  %437 = vmatprep.subr.mxu0 0.0
  %438 = vmatpush1.msra.mxu0 0.0
  %439 = vmatprep.subr.mxu0 0.0
  %440 = vmatpush1.msra.mxu0 0.0
  %441 = vmatprep.subr.mxu0 0.0
  %442 = vmatpush1.msra.mxu0 0.0
  %443 = vmatprep.subr.mxu0 0.0
  %444 = vmatpush1.msra.mxu0 0.0
  %445 = vmatprep.subr.mxu0 0.0
  %446 = vmatpush1.msra.mxu0 0.0
  %447 = vmatprep.subr.mxu0 0.0
  %448 = vmatpush1.msra.mxu0 0.0
  %449 = vmatprep.subr.mxu0 0.0
  %450 = vmatpush1.msra.mxu0 0.0
  %451 = vmatprep.subr.mxu0 0.0
  %452 = vmatpush1.msra.mxu0 0.0
  %453 = vmatprep.mubr.f32.mxu0 0.0
  %454 = vmatmul.mubr.f32.gmra.mrb[0].mxu0 %v342
  %v455 = vpop.f32.mrb[0].mxu0
  %v456 = vadd.f32 0.0, %v455
  %v457 = vpop.f32.mrb[0].mxu0
  %458 = vmatprep.mubr.f32.mxu0 0.0
  %459 = vmatmul.mubr.f32.gmra.mrb[0].mxu0 %v345
  %v460 = vpop.f32.mrb[0].mxu0
  %v461 = vadd.f32 0.0, %v460
  %v462 = vpop.f32.mrb[0].mxu0
  %463 = vmatprep.mubr.f32.mxu0 0.0
  %464 = vmatmul.mubr.f32.gmra.mrb[0].mxu0 %v348
  %v465 = vpop.f32.mrb[0].mxu0
  %v466 = vadd.f32 0.0, %v465
  %v467 = vpop.f32.mrb[0].mxu0
  %468 = vmatprep.mubr.f32.mxu0 0.0
  %469 = vmatmul.mubr.f32.gmra.mrb[0].mxu0 %v351
  %v470 = vpop.f32.mrb[0].mxu0
  %v471 = vadd.f32 0.0, %v470
  %v472 = vpop.f32.mrb[0].mxu0
  %473 = vmatprep.mubr.f32.mxu0 0.0
  %474 = vmatmul.mubr.f32.gmra.mrb[0].mxu0 %v354
  %v475 = vpop.f32.mrb[0].mxu0
  %v476 = vadd.f32 0.0, %v475
  %v477 = vpop.f32.mrb[0].mxu0
  %478 = vmatprep.mubr.f32.mxu0 0.0
  %479 = vmatmul.mubr.f32.gmra.mrb[0].mxu0 %v357
  %v480 = vpop.f32.mrb[0].mxu0
  %v481 = vadd.f32 0.0, %v480
  %v482 = vpop.f32.mrb[0].mxu0
  %483 = vmatprep.mubr.f32.mxu0 0.0
  %484 = vmatmul.mubr.f32.gmra.mrb[0].mxu0 %v360
  %v485 = vpop.f32.mrb[0].mxu0
  %v486 = vadd.f32 0.0, %v485
  %v487 = vpop.f32.mrb[0].mxu0
  %488 = vmatprep.mubr.f32.mxu0 0.0
  %489 = vmatmul.mubr.f32.gmra.mrb[0].mxu0 %v363
  %v490 = vpop.f32.mrb[0].mxu0
  %v491 = vadd.f32 0.0, %v490
  %v492 = vpop.f32.mrb[0].mxu0
  %493 = vmatprep.mubr.f32.mxu0 0.0
  %494 = vmatmul.mubr.f32.gmra.mrb[0].mxu0 %v366
  %v495 = vpop.f32.mrb[0].mxu0
  %v496 = vadd.f32 0.0, %v495
  %v497 = vpop.f32.mrb[0].mxu0
  %498 = vmatprep.mubr.f32.mxu0 0.0
  %499 = vmatmul.mubr.f32.gmra.mrb[0].mxu0 %v369
  %v500 = vpop.f32.mrb[0].mxu0
  %v501 = vadd.f32 0.0, %v500
  %v502 = vpop.f32.mrb[0].mxu0
  %503 = vmatprep.mubr.f32.mxu0 0.0
  %504 = vmatmul.mubr.f32.gmra.mrb[0].mxu0 %v372
  %v505 = vpop.f32.mrb[0].mxu0
  %v506 = vadd.f32 0.0, %v505
  %v507 = vpop.f32.mrb[0].mxu0
  %508 = vmatprep.mubr.f32.mxu0 0.0
  %509 = vmatmul.mubr.f32.gmra.mrb[0].mxu0 %v375
  %v510 = vpop.f32.mrb[0].mxu0
  %v511 = vadd.f32 0.0, %v510
  %v512 = vpop.f32.mrb[0].mxu0
  %513 = vmatprep.mubr.f32.mxu0 0.0
  %514 = vmatmul.mubr.f32.gmra.mrb[0].mxu0 %v378
  %v515 = vpop.f32.mrb[0].mxu0
  %v516 = vadd.f32 0.0, %v515
  %v517 = vpop.f32.mrb[0].mxu0
  %518 = vmatprep.mubr.f32.mxu0 0.0
  %519 = vmatmul.mubr.f32.gmra.mrb[0].mxu0 %v381
  %v520 = vpop.f32.mrb[0].mxu0
  %v521 = vadd.f32 0.0, %v520
  %v522 = vpop.f32.mrb[0].mxu0
  %523 = vmatprep.mubr.f32.mxu0 0.0
  %524 = vmatmul.mubr.f32.gmra.mrb[0].mxu0 %v384
  %v525 = vpop.f32.mrb[0].mxu0
  %v526 = vadd.f32 0.0, %v525
  %v527 = vpop.f32.mrb[0].mxu0
  %528 = vmatprep.mubr.f32.mxu0 0.0
  %529 = vmatmul.mubr.f32.gmra.mrb[0].mxu0 %v387
  %v530 = vpop.f32.mrb[0].mxu0
  %v531 = vadd.f32 0.0, %v530
  %v532 = vpop.f32.mrb[0].mxu0
  %533 = vdwg.mxu0
  %534 = vmatprep.subr.mxu0 0.0
  %535 = vmatpush1.xpose.msra.mxu0 %v456
  %536 = vmatprep.subr.mxu0 0.0
  %537 = vmatpush1.xpose.msra.mxu0 %v461
  %538 = vmatprep.subr.mxu0 0.0
  %539 = vmatpush1.xpose.msra.mxu0 %v466
  %540 = vmatprep.subr.mxu0 0.0
  %541 = vmatpush1.xpose.msra.mxu0 %v471
  %542 = vmatprep.subr.mxu0 0.0
  %543 = vmatpush1.xpose.msra.mxu0 %v476
  %544 = vmatprep.subr.mxu0 0.0
  %545 = vmatpush1.xpose.msra.mxu0 %v481
  %546 = vmatprep.subr.mxu0 0.0
  %547 = vmatpush1.xpose.msra.mxu0 %v486
  %548 = vmatprep.subr.mxu0 0.0
  %549 = vmatpush1.xpose.msra.mxu0 %v491
  %550 = vmatprep.subr.mxu0 0.0
  %551 = vmatpush1.xpose.msra.mxu0 %v496
  %552 = vmatprep.subr.mxu0 0.0
  %553 = vmatpush1.xpose.msra.mxu0 %v501
  %554 = vmatprep.subr.mxu0 0.0
  %555 = vmatpush1.xpose.msra.mxu0 %v506
  %556 = vmatprep.subr.mxu0 0.0
  %557 = vmatpush1.xpose.msra.mxu0 %v511
  %558 = vmatprep.subr.mxu0 0.0
  %559 = vmatpush1.xpose.msra.mxu0 %v516
  %560 = vmatprep.subr.mxu0 0.0
  %561 = vmatpush1.xpose.msra.mxu0 %v521
  %562 = vmatprep.subr.mxu0 0.0
  %563 = vmatpush1.xpose.msra.mxu0 %v526
  %564 = vmatprep.subr.mxu0 0.0
  %565 = vmatpush1.xpose.msra.mxu0 %v531
  %566 = vmatprep.subr.mxu0 0.0
  %567 = vmatpush1.xpose.msra.mxu0 0.0
  %568 = vmatprep.subr.mxu0 0.0
  %569 = vmatpush1.xpose.msra.mxu0 0.0
  %570 = vmatprep.subr.mxu0 0.0
  %571 = vmatpush1.xpose.msra.mxu0 0.0
  %572 = vmatprep.subr.mxu0 0.0
  %573 = vmatpush1.xpose.msra.mxu0 0.0
  %574 = vmatprep.subr.mxu0 0.0
  %575 = vmatpush1.xpose.msra.mxu0 0.0
  %576 = vmatprep.subr.mxu0 0.0
  %577 = vmatpush1.xpose.msra.mxu0 0.0
  %578 = vmatprep.subr.mxu0 0.0
  %579 = vmatpush1.xpose.msra.mxu0 0.0
  %580 = vmatprep.subr.mxu0 0.0
  %581 = vmatpush1.xpose.msra.mxu0 0.0
  %582 = vmatprep.subr.mxu0 0.0
  %583 = vmatpush1.xpose.msra.mxu0 0.0
  %584 = vmatprep.subr.mxu0 0.0
  %585 = vmatpush1.xpose.msra.mxu0 0.0
  %586 = vmatprep.subr.mxu0 0.0
  %587 = vmatpush1.xpose.msra.mxu0 0.0
  %588 = vmatprep.subr.mxu0 0.0
  %589 = vmatpush1.xpose.msra.mxu0 0.0
  %590 = vmatprep.subr.mxu0 0.0
  %591 = vmatpush1.xpose.msra.mxu0 0.0
  %592 = vmatprep.subr.mxu0 0.0
  %593 = vmatpush1.xpose.msra.mxu0 0.0
  %594 = vmatprep.subr.mxu0 0.0
  %595 = vmatpush1.xpose.msra.mxu0 0.0
  %596 = vmatprep.subr.mxu0 0.0
  %597 = vmatpush1.xpose.msra.mxu0 0.0
  %598 = vmatprep.mubr.f32.mxu0 0.0
  %599 = vmatmul.mubr.f32.gmra.mrb[0].mxu0 %v322
  %v600 = vpop.f32.mrb[0].mxu0
  %v601 = vadd.f32 0.0, %v600
  %v602 = vpop.f32.mrb[0].mxu0
  %603 = vdwg.mxu0
  %v604 = vlaneseq
  %v605 = vshrl.u32 %v604, 7
  %v606 = vlaneseq
  %v607 = vand.u32 %v606, 127
  %vm608 = vcmp.eq.s32.totalorder %v605, %v607
  %v609 = vsel %vm608, %v601, 0.0
  %v610 = vrot.slane %v609, 4
  %v611 = vadd.f32 %v609, %v610
  %v612 = vrot.slane %v611, 2
  %v613 = vadd.f32 %v611, %v612
  %v614 = vrot.slane %v613, 1
  %v615 = vadd.f32 %v613, %v614
  %616 = vst [vmem:[%s5] sm:$0x1] %v615
  // Predicated region
  $region22: #{forward.1} parent=0 // pred_check
    _
  $region23: #{forward.1} parent=0 // pred_check_branch
    %618 = sbr.rel (0) target = $region25
  $region24: #{forward.1} parent=0 // pred_region
    _
  $region25: #{forward.1} parent=0 // pred_fallthru
    _
  // Predicated region
  $region26: #{forward.1} parent=0 // pred_check
    _
  $region27: #{forward.1} parent=0 // pred_check_branch
    %620 = sbr.rel (0) target = $region29
  $region28: #{forward.1} parent=0 // pred_region
    _
  $region29: #{forward.1} parent=0 // pred_fallthru
    _

</llo_original>
